<compile_context>
chip_gen: v7x
topology: tpu7x:2x2x1
jax: 0.10.0
libtpu: 0.0.40
codegen_flags: <defaults>
</compile_context>

<pallas_src>
import functools

import numpy as np
import jax
import jax.numpy as jnp
from jax.experimental import pallas as pl
from jax.experimental.pallas import tpu as pltpu

LANE = 128


def _round_up(n, m):
    return ((n + m - 1) // m) * m


# ---------------- the Pallas kernel: full forward pass ----------------
def _adv_kernel(x_ref, w1_ref, b1_ref, w2_ref, b2_ref, w3_ref, b3_ref, out_ref,
                *, training, keep_prob, seed, compute_dtype):
    f32 = jnp.float32
    x = x_ref[...]

    def dropout(h, salt):
        # Counter-based hash PRNG (murmur-style finalizer) in pure jnp integer ops:
        # portable (TPU + interpret) and cheap (VPU only).  Scale fused into the mask.
        if (not training) or keep_prob >= 1.0:
            return h
        shape = h.shape
        rows = jax.lax.broadcasted_iota(jnp.int32, shape, 0).astype(jnp.uint32)
        cols = jax.lax.broadcasted_iota(jnp.int32, shape, 1).astype(jnp.uint32)
        tile = pl.program_id(0).astype(jnp.uint32)
        idx = (tile * jnp.uint32(shape[0]) + rows) * jnp.uint32(shape[1]) + cols
        z = idx ^ jnp.uint32(seed & 0xFFFFFFFF) ^ jnp.uint32(salt)
        z = z ^ (z >> 16)
        z = z * jnp.uint32(0x85EBCA6B)
        z = z ^ (z >> 13)
        z = z * jnp.uint32(0xC2B2AE35)
        z = z ^ (z >> 16)
        thresh = jnp.uint32(min(int(round(keep_prob * (2.0 ** 32))), 2 ** 32 - 1))
        return jnp.where(z < thresh, h * (1.0 / keep_prob), 0.0)

    # ad_layer1 -> relu -> dropout   (MXU, f32 accumulation)
    h = jnp.dot(x, w1_ref[...], preferred_element_type=f32) + b1_ref[...]
    h = jnp.maximum(h, 0.0)
    h = dropout(h, 0x9E3779B1)

    # ad_layer2 -> relu -> dropout
    h = jnp.dot(h.astype(compute_dtype), w2_ref[...],
                preferred_element_type=f32) + b2_ref[...]
    h = jnp.maximum(h, 0.0)
    h = dropout(h, 0x7F4A7C15)

    # ad_layer3 (single output unit): VPU multiply + cross-lane reduce (XLU slot),
    # then sigmoid via a single EUP tanh.  Output block is a true [tb, 1] column.
    logit = jnp.sum(h * w3_ref[...].astype(f32), axis=-1, keepdims=True) + b3_ref[...]
    out_ref[...] = 0.5 * (jnp.tanh(0.5 * logit) + 1.0)


# ---------------- wrapper: padding, packing, batch grid ----------------
def adversarial_network_forward(params, x, coeff=1.0, *, training=False, seed=0,
                                tile_b=1024, compute_dtype=jnp.float32):
    # `coeff` only scales the reversed gradient in PyTorch (backward hook);
    # it does not change the forward output.
    del coeff
    w1, b1, w2, b2, w3, b3 = params
    B, in_feature = x.shape
    hidden = w1.shape[1]
    Hp = _round_up(hidden, LANE)          # lane-dense hidden dimension
    f32 = jnp.float32

    # ---- zero-pad the hidden dim so every weight/activation is 128-lane aligned ----
    w1p = jnp.zeros((in_feature, Hp), f32).at[:, :hidden].set(w1).astype(compute_dtype)
    b1p = jnp.zeros((1, Hp), f32).at[:, :hidden].set(b1)
    w2p = jnp.zeros((Hp, Hp), f32).at[:hidden, :hidden].set(w2).astype(compute_dtype)
    b2p = jnp.zeros((1, Hp), f32).at[:, :hidden].set(b2)
    w3p = jnp.zeros((1, Hp), f32).at[:, :hidden].set(w3[:, 0][None, :]).astype(compute_dtype)
    b3p = jnp.reshape(b3, (1, 1)).astype(f32)

    # ---- batch tiling: big tiles, >=2 roughly balanced steps when possible (v7x: 2 TCs) ----
    if B >= 2 * tile_b:
        tb = tile_b
    elif B > 16:
        tb = _round_up((B + 1) // 2, 8)
    else:
        tb = 8
    Bp = _round_up(B, tb)
    xp = x.astype(compute_dtype)
    if Bp != B:
        xp = jnp.pad(xp, ((0, Bp - B), (0, 0)))
    grid = (Bp // tb,)

    # ---- VMEM budget: double-buffered x/out + params + intermediates, capped for v7x ----
    isz = jnp.dtype(compute_dtype).itemsize
    param_bytes = (in_feature * Hp + Hp * Hp + Hp) * isz + (2 * Hp + 1) * 4
    est = 2 * tb * in_feature * isz + 2 * tb * 4 + 2 * param_bytes + 4 * tb * Hp * 4
    vmem_limit = int(min(max(32 * 2 ** 20, 2 * est), 64 * 2 ** 20))

    kernel = functools.partial(_adv_kernel, training=training, keep_prob=0.5,
                               seed=int(seed), compute_dtype=compute_dtype)

    out = pl.pallas_call(
        kernel,
        out_shape=jax.ShapeDtypeStruct((Bp, 1), jnp.float32),
        grid=grid,
        in_specs=[
            pl.BlockSpec((tb, in_feature), lambda i: (i, 0)),   # batch-tiled activations
            pl.BlockSpec((in_feature, Hp), lambda i: (0, 0)),   # grid-invariant params
            pl.BlockSpec((1, Hp), lambda i: (0, 0)),
            pl.BlockSpec((Hp, Hp), lambda i: (0, 0)),
            pl.BlockSpec((1, Hp), lambda i: (0, 0)),
            pl.BlockSpec((1, Hp), lambda i: (0, 0)),
            pl.BlockSpec((1, 1), lambda i: (0, 0)),
        ],
        out_specs=pl.BlockSpec((tb, 1), lambda i: (i, 0)),      # true (B,1) column output
        compiler_params=pltpu.CompilerParams(
            dimension_semantics=("parallel",),
            vmem_limit_bytes=vmem_limit),
    )(xp, w1p, b1p, w2p, b2p, w3p, b3p)

    return out[:B]


# ---------------- pure-JAX reference (eval mode: dropout = identity) ----------------
def reference_forward(params, x):
    w1, b1, w2, b2, w3, b3 = params
    h = jnp.maximum(x @ w1 + b1, 0.0)
    h = jnp.maximum(h @ w2 + b2, 0.0)
    return jax.nn.sigmoid(h @ w3 + b3)


# ---------------- deterministic parameter init (matches init_weights: xavier_normal, zero bias) ----------------
def init_params(key, in_feature, hidden_size):
    k1, k2, k3 = jax.random.split(key, 3)

    def xavier_normal(k, nin, nout):
        std = np.sqrt(2.0 / (nin + nout))
        return std * jax.random.normal(k, (nin, nout), jnp.float32)

    w1 = xavier_normal(k1, in_feature, hidden_size)
    b1 = jnp.zeros((1, hidden_size), jnp.float32)
    w2 = xavier_normal(k2, hidden_size, hidden_size)
    b2 = jnp.zeros((1, hidden_size), jnp.float32)
    w3 = xavier_normal(k3, hidden_size, 1)
    b3 = jnp.zeros((1, 1), jnp.float32)
    return [w1, b1, w2, b2, w3, b3]


if __name__ == "__main__":
    B, in_feature, hidden = 200, 64, 32   # small, but exercises padding + 2-step batch grid
    coeff = 1.0

    key = jax.random.PRNGKey(0)
    kx, kp = jax.random.split(key)
    x = jax.random.normal(kx, (B, in_feature), jnp.float32)
    params = init_params(kp, in_feature, hidden)

    # eval / inference semantics (dropout = identity): assert against pure-JAX reference
    out = jax.block_until_ready(
        adversarial_network_forward(params, x, coeff, training=False))
    ref = jax.block_until_ready(reference_forward(params, x))
    assert out.shape == (B, 1)
    np.testing.assert_allclose(np.asarray(out), np.asarray(ref), rtol=1e-5, atol=1e-5)

    # training semantics (in-kernel hash-PRNG dropout): run once, sanity-check the output
    out_tr = jax.block_until_ready(
        adversarial_network_forward(params, x, coeff, training=True, seed=123))
    o = np.asarray(out_tr)
    assert out_tr.shape == (B, 1)
    assert np.all(np.isfinite(o)) and np.all(o >= 0.0) and np.all(o <= 1.0)

    print("KERNEL_OK")
</pallas_src>

<mosaic_0001>
module attributes {stable_mosaic.version = 11 : i64} {
  func.func @_adv_kernel(%arg0: i32, %arg1: memref<104x64xf32, #tpu.memory_space<vmem>>, %arg2: memref<64x128xf32, #tpu.memory_space<vmem>>, %arg3: memref<1x128xf32, #tpu.memory_space<vmem>>, %arg4: memref<128x128xf32, #tpu.memory_space<vmem>>, %arg5: memref<1x128xf32, #tpu.memory_space<vmem>>, %arg6: memref<1x128xf32, #tpu.memory_space<vmem>>, %arg7: memref<1x1xf32, #tpu.memory_space<vmem>>, %arg8: memref<104x1xf32, #tpu.memory_space<vmem>>) attributes {dimension_semantics = [#tpu.dimension_semantics<parallel>], iteration_bounds = array<i64: 2>, scalar_prefetch = 0 : i64, scratch_operands = 0 : i64, tpu.core_type = #tpu.core_type<tc>, window_params = [{transform_indices = @transform_0, window_bounds = array<i64: 104, 64>}, {pipeline_mode = #tpu.pipeline_mode<synchronous>, transform_indices = @transform_1, window_bounds = array<i64: 64, 128>}, {pipeline_mode = #tpu.pipeline_mode<synchronous>, transform_indices = @transform_2, window_bounds = array<i64: 1, 128>}, {pipeline_mode = #tpu.pipeline_mode<synchronous>, transform_indices = @transform_3, window_bounds = array<i64: 128, 128>}, {pipeline_mode = #tpu.pipeline_mode<synchronous>, transform_indices = @transform_4, window_bounds = array<i64: 1, 128>}, {pipeline_mode = #tpu.pipeline_mode<synchronous>, transform_indices = @transform_5, window_bounds = array<i64: 1, 128>}, {pipeline_mode = #tpu.pipeline_mode<synchronous>, transform_indices = @transform_6, window_bounds = array<i64: 1, 1>}, {transform_indices = @transform_7, window_bounds = array<i64: 104, 1>}]} {
    %c0 = arith.constant 0 : index
    %c0_0 = arith.constant 0 : index
    %0 = vector.load %arg1[%c0, %c0_0] : memref<104x64xf32, #tpu.memory_space<vmem>>, vector<104x64xf32>
    %c0_1 = arith.constant 0 : index
    %c0_2 = arith.constant 0 : index
    %1 = vector.load %arg2[%c0_1, %c0_2] : memref<64x128xf32, #tpu.memory_space<vmem>>, vector<64x128xf32>
    %cst = arith.constant dense<0.000000e+00> : vector<104x128xf32>
    %2 = tpu.matmul %0, %1, %cst {dimension_numbers = #tpu.dot_dimension_numbers<[1], [0], [0], [1], [0, 0, 1, 1], [], []>} : vector<104x64xf32>, vector<64x128xf32>, vector<104x128xf32> -> vector<104x128xf32>
    %c0_3 = arith.constant 0 : index
    %c0_4 = arith.constant 0 : index
    %3 = vector.load %arg3[%c0_3, %c0_4] : memref<1x128xf32, #tpu.memory_space<vmem>>, vector<1x128xf32>
    %4 = vector.broadcast %3 : vector<1x128xf32> to vector<104x128xf32>
    %5 = arith.addf %2, %4 : vector<104x128xf32>
    %cst_5 = arith.constant 0.000000e+00 : f32
    %6 = vector.broadcast %cst_5 : f32 to vector<104x128xf32>
    %7 = arith.maximumf %5, %6 : vector<104x128xf32>
    %c0_6 = arith.constant 0 : index
    %c0_7 = arith.constant 0 : index
    %8 = vector.load %arg4[%c0_6, %c0_7] : memref<128x128xf32, #tpu.memory_space<vmem>>, vector<128x128xf32>
    %cst_8 = arith.constant dense<0.000000e+00> : vector<104x128xf32>
    %9 = tpu.matmul %7, %8, %cst_8 {dimension_numbers = #tpu.dot_dimension_numbers<[1], [0], [0], [1], [0, 0, 1, 1], [], []>} : vector<104x128xf32>, vector<128x128xf32>, vector<104x128xf32> -> vector<104x128xf32>
    %c0_9 = arith.constant 0 : index
    %c0_10 = arith.constant 0 : index
    %10 = vector.load %arg5[%c0_9, %c0_10] : memref<1x128xf32, #tpu.memory_space<vmem>>, vector<1x128xf32>
    %11 = vector.broadcast %10 : vector<1x128xf32> to vector<104x128xf32>
    %12 = arith.addf %9, %11 : vector<104x128xf32>
    %cst_11 = arith.constant 0.000000e+00 : f32
    %13 = vector.broadcast %cst_11 : f32 to vector<104x128xf32>
    %14 = arith.maximumf %12, %13 : vector<104x128xf32>
    %c0_12 = arith.constant 0 : index
    %c0_13 = arith.constant 0 : index
    %15 = vector.load %arg6[%c0_12, %c0_13] : memref<1x128xf32, #tpu.memory_space<vmem>>, vector<1x128xf32>
    %16 = vector.broadcast %15 : vector<1x128xf32> to vector<104x128xf32>
    %17 = arith.mulf %14, %16 : vector<104x128xf32>
    %cst_14 = arith.constant dense<0.000000e+00> : vector<104xf32>
    %18 = vector.multi_reduction <add>, %17, %cst_14 [1] : vector<104x128xf32> to vector<104xf32>
    %19 = vector.shape_cast %18 : vector<104xf32> to vector<104x1xf32>
    %c0_15 = arith.constant 0 : index
    %c0_16 = arith.constant 0 : index
    %20 = vector.load %arg7[%c0_15, %c0_16] : memref<1x1xf32, #tpu.memory_space<vmem>>, vector<1x1xf32>
    %21 = vector.broadcast %20 : vector<1x1xf32> to vector<104x1xf32>
    %22 = arith.addf %19, %21 : vector<104x1xf32>
    %cst_17 = arith.constant 5.000000e-01 : f32
    %23 = vector.broadcast %cst_17 : f32 to vector<104x1xf32>
    %24 = arith.mulf %23, %22 : vector<104x1xf32>
    %25 = math.tanh %24 : vector<104x1xf32>
    %cst_18 = arith.constant 1.000000e+00 : f32
    %26 = vector.broadcast %cst_18 : f32 to vector<104x1xf32>
    %27 = arith.addf %25, %26 : vector<104x1xf32>
    %cst_19 = arith.constant 5.000000e-01 : f32
    %28 = vector.broadcast %cst_19 : f32 to vector<104x1xf32>
    %29 = arith.mulf %28, %27 : vector<104x1xf32>
    %c0_20 = arith.constant 0 : index
    %c0_21 = arith.constant 0 : index
    %30 = vector.load %arg8[%c0_20, %c0_21] : memref<104x1xf32, #tpu.memory_space<vmem>>, vector<104x1xf32>
    tpu.vector_store %arg8[%c0_20, %c0_21], %29 {strides = array<i32>} : memref<104x1xf32, #tpu.memory_space<vmem>>, vector<104x1xf32>,
    return
  }
  func.func @transform_0(%arg0: i32) -> (i32, i32) {
    %c0_i32 = arith.constant 0 : i32
    %c0_i32_0 = arith.constant 0 : i32
    return %arg0, %c0_i32 : i32, i32
  }
  func.func @transform_1(%arg0: i32) -> (i32, i32) {
    %c0_i32 = arith.constant 0 : i32
    %c0_i32_0 = arith.constant 0 : i32
    %c0_i32_1 = arith.constant 0 : i32
    return %c0_i32, %c0_i32_0 : i32, i32
  }
  func.func @transform_2(%arg0: i32) -> (i32, i32) {
    %c0_i32 = arith.constant 0 : i32
    %c0_i32_0 = arith.constant 0 : i32
    %c0_i32_1 = arith.constant 0 : i32
    return %c0_i32, %c0_i32_0 : i32, i32
  }
  func.func @transform_3(%arg0: i32) -> (i32, i32) {
    %c0_i32 = arith.constant 0 : i32
    %c0_i32_0 = arith.constant 0 : i32
    %c0_i32_1 = arith.constant 0 : i32
    return %c0_i32, %c0_i32_0 : i32, i32
  }
  func.func @transform_4(%arg0: i32) -> (i32, i32) {
    %c0_i32 = arith.constant 0 : i32
    %c0_i32_0 = arith.constant 0 : i32
    %c0_i32_1 = arith.constant 0 : i32
    return %c0_i32, %c0_i32_0 : i32, i32
  }
  func.func @transform_5(%arg0: i32) -> (i32, i32) {
    %c0_i32 = arith.constant 0 : i32
    %c0_i32_0 = arith.constant 0 : i32
    %c0_i32_1 = arith.constant 0 : i32
    return %c0_i32, %c0_i32_0 : i32, i32
  }
  func.func @transform_6(%arg0: i32) -> (i32, i32) {
    %c0_i32 = arith.constant 0 : i32
    %c0_i32_0 = arith.constant 0 : i32
    %c0_i32_1 = arith.constant 0 : i32
    return %c0_i32, %c0_i32_0 : i32, i32
  }
  func.func @transform_7(%arg0: i32) -> (i32, i32) {
    %c0_i32 = arith.constant 0 : i32
    %c0_i32_0 = arith.constant 0 : i32
    return %arg0, %c0_i32 : i32, i32
  }
}

</mosaic_0001>

<llo_original>
// kernel: tpu_custom_call.1
$region0: #{tpu_custom_call.1}
  #allocation0 [shape = 'u32[]', space=smem, size = 0x4, offset = 0x4, fixed_abs, tag = 'smem constant byte address 0x4 - core index']
  #allocation1 [shape = 'u32[144,128]{1,0:T(1,128)}', space=vmem, size = 0x12000, scoped, tag = 'internal scratch']
  #allocation2 [shape = 'f32[1,1]{1,0:T(1,128)S(1)}', space=vmem, size = 0x200, scoped, tag = 'scoped memory for tpu_custom_call.1']
  %s0 = inlined_call_operand.vmem [shape: f32[208,64], index: 0, kind: input, shape index: {}]
  %s1 = inlined_call_operand.vmem [shape: f32[64,128], index: 1, kind: input, shape index: {}]
  %s2 = inlined_call_operand.vmem [shape: f32[1,128], index: 2, kind: input, shape index: {}]
  %s3 = inlined_call_operand.vmem [shape: f32[128,128], index: 3, kind: input, shape index: {}]
  %s4 = inlined_call_operand.vmem [shape: f32[1,128], index: 4, kind: input, shape index: {}]
  %s5 = inlined_call_operand.vmem [shape: f32[1,128], index: 5, kind: input, shape index: {}]
  %s6 = inlined_call_operand.<no memory space> [shape: f32[1,1], index: 6, kind: input, shape index: {}]
  %s7 = inlined_call_operand.vmem [shape: f32[208,1], index: 7, kind: output, shape index: {}]
  %s8 = sld [smem:[#allocation0]]
  $region61: #{tpu_custom_call.1} parent=0
    _
  %s10 = ssub.s32 1, %s8
  %s11 = scalar_select 0, %s10, %s8
  %v12 = vstv %s6
  %13 = vst [vmem:[#allocation2] sm:$0x1] %v12
  loop: start=0, step=1, limit=4
  $region2: #{tpu_custom_call.1} parent=0 // loop_pre_header
    _
  $region3: #{tpu_custom_call.1} parent=0 // loop_header
    %s15 = sphi 0, %s19
    %p16 = scmp.ge.s32.totalorder %s15, 4
    %s25 = sphi 0, %s27
    %s28 = sphi 0, %s25
    %s29 = sphi 0, %s28
    %s45 = sphi 0, %s29
    %s49 = sphi 0, %s49
    %s51 = sphi 0, %s49
    %s52 = sphi 0, %s51
    %s66 = sphi 0, %s52
    %s70 = sphi 0, %s70
    %s72 = sphi 0, %s70
    %s73 = sphi 0, %s72
    %s87 = sphi 0, %s73
    %s91 = sphi 0, %s91
    %s93 = sphi 0, %s91
    %s94 = sphi 0, %s93
    %s108 = sphi 0, %s94
    %s112 = sphi 0, %s112
    %s114 = sphi 0, %s112
    %s115 = sphi 0, %s114
    %s129 = sphi 0, %s115
    %s133 = sphi 0, %s133
    %s135 = sphi 0, %s133
    %s136 = sphi 0, %s135
    %s150 = sphi 0, %s136
    %s154 = sphi 0, %s154
    %s156 = sphi 0, %s154
    %s157 = sphi 0, %s156
    %s171 = sphi 0, %s157
    %s177 = sphi 0, %s179
    %s180 = sphi 0, %s177
    %s181 = sphi 0, %s180
    %s197 = sphi 0, %s181
  $region4: #{tpu_custom_call.1} parent=0 // loop_header_branch
    %18 = sbr.rel (%p16) target = $region8
  $region5: #{tpu_custom_call.1} parent=0 // loop_body
    %s20 = ssub.s32 %s15, 1
    %s21 = ssub.s32 %s15, 2
    %s22 = sadd.s32 %s15, 1
    %s23 = ssub.s32 %s15, %s22
    %p24 = scmp.eq.s32.totalorder %s23, 0
    %s26 = sadd.s32 %s25, 1
    %s27 = scalar_select %p24, %s25, %s26
    %p30 = pneg %p24
    %p31 = scmp.eq.s32.totalorder %s15, 1
    %p32 = por %p30, %p31
    %p33 = scmp.ne.s32.totalorder %s25, %s28
    %p34 = scmp.eq.s32.totalorder %s15, 0
    %p35 = por %p33, %p34
    %p36 = scmp.ne.s32.totalorder %s25, %s28
    %p37 = scmp.eq.s32.totalorder %s20, 1
    %p38 = por %p36, %p37
    %p39 = scmp.ne.s32.totalorder %s28, %s29
    %p40 = scmp.eq.s32.totalorder %s20, 0
    %p41 = por %p39, %p40
    %p42 = scmp.ne.s32.totalorder %s28, %s29
    %p43 = scmp.eq.s32.totalorder %s21, 1
    %p44 = por %p42, %p43
    %p46 = scmp.ne.s32.totalorder %s29, %s45
    %p47 = scmp.eq.s32.totalorder %s21, 0
    %p48 = por %p46, %p47
    %s50 = sadd.s32 %s49, 1
    %p53 = scmp.eq.s32.totalorder %s15, 1
    %p54 = scmp.ne.s32.totalorder %s49, %s51
    %p55 = scmp.eq.s32.totalorder %s15, 0
    %p56 = por %p54, %p55
    %p57 = scmp.ne.s32.totalorder %s49, %s51
    %p58 = scmp.eq.s32.totalorder %s20, 1
    %p59 = por %p57, %p58
    %p60 = scmp.ne.s32.totalorder %s51, %s52
    %p61 = scmp.eq.s32.totalorder %s20, 0
    %p62 = por %p60, %p61
    %p63 = scmp.ne.s32.totalorder %s51, %s52
    %p64 = scmp.eq.s32.totalorder %s21, 1
    %p65 = por %p63, %p64
    %p67 = scmp.ne.s32.totalorder %s52, %s66
    %p68 = scmp.eq.s32.totalorder %s21, 0
    %p69 = por %p67, %p68
    %s71 = sadd.s32 %s70, 1
    %p74 = scmp.eq.s32.totalorder %s15, 1
    %p75 = scmp.ne.s32.totalorder %s70, %s72
    %p76 = scmp.eq.s32.totalorder %s15, 0
    %p77 = por %p75, %p76
    %p78 = scmp.ne.s32.totalorder %s70, %s72
    %p79 = scmp.eq.s32.totalorder %s20, 1
    %p80 = por %p78, %p79
    %p81 = scmp.ne.s32.totalorder %s72, %s73
    %p82 = scmp.eq.s32.totalorder %s20, 0
    %p83 = por %p81, %p82
    %p84 = scmp.ne.s32.totalorder %s72, %s73
    %p85 = scmp.eq.s32.totalorder %s21, 1
    %p86 = por %p84, %p85
    %p88 = scmp.ne.s32.totalorder %s73, %s87
    %p89 = scmp.eq.s32.totalorder %s21, 0
    %p90 = por %p88, %p89
    %s92 = sadd.s32 %s91, 1
    %p95 = scmp.eq.s32.totalorder %s15, 1
    %p96 = scmp.ne.s32.totalorder %s91, %s93
    %p97 = scmp.eq.s32.totalorder %s15, 0
    %p98 = por %p96, %p97
    %p99 = scmp.ne.s32.totalorder %s91, %s93
    %p100 = scmp.eq.s32.totalorder %s20, 1
    %p101 = por %p99, %p100
    %p102 = scmp.ne.s32.totalorder %s93, %s94
    %p103 = scmp.eq.s32.totalorder %s20, 0
    %p104 = por %p102, %p103
    %p105 = scmp.ne.s32.totalorder %s93, %s94
    %p106 = scmp.eq.s32.totalorder %s21, 1
    %p107 = por %p105, %p106
    %p109 = scmp.ne.s32.totalorder %s94, %s108
    %p110 = scmp.eq.s32.totalorder %s21, 0
    %p111 = por %p109, %p110
    %s113 = sadd.s32 %s112, 1
    %p116 = scmp.eq.s32.totalorder %s15, 1
    %p117 = scmp.ne.s32.totalorder %s112, %s114
    %p118 = scmp.eq.s32.totalorder %s15, 0
    %p119 = por %p117, %p118
    %p120 = scmp.ne.s32.totalorder %s112, %s114
    %p121 = scmp.eq.s32.totalorder %s20, 1
    %p122 = por %p120, %p121
    %p123 = scmp.ne.s32.totalorder %s114, %s115
    %p124 = scmp.eq.s32.totalorder %s20, 0
    %p125 = por %p123, %p124
    %p126 = scmp.ne.s32.totalorder %s114, %s115
    %p127 = scmp.eq.s32.totalorder %s21, 1
    %p128 = por %p126, %p127
    %p130 = scmp.ne.s32.totalorder %s115, %s129
    %p131 = scmp.eq.s32.totalorder %s21, 0
    %p132 = por %p130, %p131
    %s134 = sadd.s32 %s133, 1
    %p137 = scmp.eq.s32.totalorder %s15, 1
    %p138 = scmp.ne.s32.totalorder %s133, %s135
    %p139 = scmp.eq.s32.totalorder %s15, 0
    %p140 = por %p138, %p139
    %p141 = scmp.ne.s32.totalorder %s133, %s135
    %p142 = scmp.eq.s32.totalorder %s20, 1
    %p143 = por %p141, %p142
    %p144 = scmp.ne.s32.totalorder %s135, %s136
    %p145 = scmp.eq.s32.totalorder %s20, 0
    %p146 = por %p144, %p145
    %p147 = scmp.ne.s32.totalorder %s135, %s136
    %p148 = scmp.eq.s32.totalorder %s21, 1
    %p149 = por %p147, %p148
    %p151 = scmp.ne.s32.totalorder %s136, %s150
    %p152 = scmp.eq.s32.totalorder %s21, 0
    %p153 = por %p151, %p152
    %s155 = sadd.s32 %s154, 1
    %p158 = scmp.eq.s32.totalorder %s15, 1
    %p159 = scmp.ne.s32.totalorder %s154, %s156
    %p160 = scmp.eq.s32.totalorder %s15, 0
    %p161 = por %p159, %p160
    %p162 = scmp.ne.s32.totalorder %s154, %s156
    %p163 = scmp.eq.s32.totalorder %s20, 1
    %p164 = por %p162, %p163
    %p165 = scmp.ne.s32.totalorder %s156, %s157
    %p166 = scmp.eq.s32.totalorder %s20, 0
    %p167 = por %p165, %p166
    %p168 = scmp.ne.s32.totalorder %s156, %s157
    %p169 = scmp.eq.s32.totalorder %s21, 1
    %p170 = por %p168, %p169
    %p172 = scmp.ne.s32.totalorder %s157, %s171
    %p173 = scmp.eq.s32.totalorder %s21, 0
    %p174 = por %p172, %p173
    %s175 = ssub.s32 %s15, %s22
    %p176 = scmp.eq.s32.totalorder %s175, 0
    %s178 = sadd.s32 %s177, 1
    %s179 = scalar_select %p176, %s177, %s178
    %p182 = pneg %p176
    %p183 = scmp.eq.s32.totalorder %s15, 1
    %p184 = por %p182, %p183
    %p185 = scmp.ne.s32.totalorder %s177, %s180
    %p186 = scmp.eq.s32.totalorder %s15, 0
    %p187 = por %p185, %p186
    %p188 = scmp.ne.s32.totalorder %s177, %s180
    %p189 = scmp.eq.s32.totalorder %s20, 1
    %p190 = por %p188, %p189
    %p191 = scmp.ne.s32.totalorder %s180, %s181
    %p192 = scmp.eq.s32.totalorder %s20, 0
    %p193 = por %p191, %p192
    %p194 = scmp.ne.s32.totalorder %s180, %s181
    %p195 = scmp.eq.s32.totalorder %s21, 1
    %p196 = por %p194, %p195
    %p198 = scmp.ne.s32.totalorder %s181, %s197
    %p199 = scmp.eq.s32.totalorder %s21, 0
    %p200 = por %p198, %p199
    %p201 = scmp.le.s32.totalorder 1, %s15
    %p202 = scmp.lt.s32.totalorder %s15, 3
    %p203 = pnand %p201, %p202
    %p204 = pneg %p203
    // Predicated region
    $region9: #{tpu_custom_call.1} parent=5 // pred_check
      _
    $region10: #{tpu_custom_call.1} parent=5 // pred_check_branch
      %206 = sbr.rel (%p203) target = $region12
    $region11: #{tpu_custom_call.1} parent=5 // pred_region
      %s207 = ssub.s32 %s15, 1
      // Predicated region
      $region13: #{tpu_custom_call.1} parent=11 // pred_check
        %p208 = pneg %p62
      $region14: #{tpu_custom_call.1} parent=11 // pred_check_branch
        %210 = sbr.rel (%p208) target = $region16
      $region15: #{tpu_custom_call.1} parent=11 // pred_region
        _
      $region16: #{tpu_custom_call.1} parent=11 // pred_fallthru
        _
      // Predicated region
      $region17: #{tpu_custom_call.1} parent=11 // pred_check
        %p211 = pneg %p83
      $region18: #{tpu_custom_call.1} parent=11 // pred_check_branch
        %213 = sbr.rel (%p211) target = $region20
      $region19: #{tpu_custom_call.1} parent=11 // pred_region
        _
      $region20: #{tpu_custom_call.1} parent=11 // pred_fallthru
        _
      // Predicated region
      $region21: #{tpu_custom_call.1} parent=11 // pred_check
        %p214 = pneg %p104
      $region22: #{tpu_custom_call.1} parent=11 // pred_check_branch
        %216 = sbr.rel (%p214) target = $region24
      $region23: #{tpu_custom_call.1} parent=11 // pred_region
        _
      $region24: #{tpu_custom_call.1} parent=11 // pred_fallthru
        _
      // Predicated region
      $region25: #{tpu_custom_call.1} parent=11 // pred_check
        %p217 = pneg %p125
      $region26: #{tpu_custom_call.1} parent=11 // pred_check_branch
        %219 = sbr.rel (%p217) target = $region28
      $region27: #{tpu_custom_call.1} parent=11 // pred_region
        _
      $region28: #{tpu_custom_call.1} parent=11 // pred_fallthru
        _
      // Predicated region
      $region29: #{tpu_custom_call.1} parent=11 // pred_check
        %p220 = pneg %p146
      $region30: #{tpu_custom_call.1} parent=11 // pred_check_branch
        %222 = sbr.rel (%p220) target = $region32
      $region31: #{tpu_custom_call.1} parent=11 // pred_region
        _
      $region32: #{tpu_custom_call.1} parent=11 // pred_fallthru
        _
      // Predicated region
      $region33: #{tpu_custom_call.1} parent=11 // pred_check
        %p223 = pneg %p167
      $region34: #{tpu_custom_call.1} parent=11 // pred_check_branch
        %225 = sbr.rel (%p223) target = $region36
      $region35: #{tpu_custom_call.1} parent=11 // pred_region
        _
      $region36: #{tpu_custom_call.1} parent=11 // pred_fallthru
        _
    $region12: #{tpu_custom_call.1} parent=5 // pred_fallthru
      _
    %p226 = scmp.lt.s32.totalorder %s15, 2
    // Predicated region
    $region37: #{tpu_custom_call.1} parent=5 // pred_check
      %p227 = pneg %p226
    $region38: #{tpu_custom_call.1} parent=5 // pred_check_branch
      %229 = sbr.rel (%p227) target = $region40
    $region39: #{tpu_custom_call.1} parent=5 // pred_region
      // Predicated region
      $region41: #{tpu_custom_call.1} parent=39 // pred_check
        %p230 = pneg %p35
      $region42: #{tpu_custom_call.1} parent=39 // pred_check_branch
        %232 = sbr.rel (%p230) target = $region44
      $region43: #{tpu_custom_call.1} parent=39 // pred_region
        %s233 = smul.u32 13, %s15
        %p234 = scmp.lt.s32.totalorder %s233, 25
        %s235 = scalar_select %p234, %s233, 25
        %s236 = smul.addr %s235, 8
        %s237 = scalar_lea.vmem %s0, %s236
        %s238 = smul.u32 13, %s15
      $region44: #{tpu_custom_call.1} parent=39 // pred_fallthru
        _
    $region40: #{tpu_custom_call.1} parent=5 // pred_fallthru
      _
    %p239 = scmp.le.s32.totalorder 1, %s15
    %p240 = scmp.lt.s32.totalorder %s15, 3
    %p241 = pnand %p239, %p240
    %p242 = pneg %p241
    // Predicated region
    $region45: #{tpu_custom_call.1} parent=5 // pred_check
      _
    $region46: #{tpu_custom_call.1} parent=5 // pred_check_branch
      %244 = sbr.rel (%p241) target = $region48
    $region47: #{tpu_custom_call.1} parent=5 // pred_region
      %s245 = ssub.s32 %s15, 1
      %s246 = smul.u32 13, %s20
      %p247 = scmp.lt.s32.totalorder %s246, 25
      %s248 = scalar_select %p247, %s246, 25
      %s249 = smul.addr %s248, 8
      %s250 = scalar_lea.vmem %s0, %s249
      %p251 = pneg %p41
      %p252 = pneg %p38
      %p253 = pneg %p62
      %p254 = pneg %p59
      %p255 = pneg %p83
      %p256 = pneg %p80
      %p257 = pneg %p104
      %p258 = pneg %p101
      %p259 = pneg %p125
      %p260 = pneg %p122
      %p261 = pneg %p146
      %p262 = pneg %p143
      %p263 = pneg %p167
      %p264 = pneg %p164
      %p265 = pneg %p193
      %p266 = pneg %p190
      %s267 = smul.u32 13, %s20
      %p268 = scmp.lt.s32.totalorder %s267, 25
      %s269 = scalar_select %p268, %s267, 25
      %s270 = smul.addr %s269, 8
      %s271 = scalar_lea.vmem %s7, %s270
      %s272 = smul.u32 13, %s20
      %p273 = scmp.lt.s32.totalorder %s272, 25
      %s274 = scalar_select %p273, %s272, 25
      %s275 = smul.addr %s274, 8
      %s276 = scalar_lea.vmem %s0, %s275
      %s277 = smul.u32 13, %s20
      %s278 = smul.u32 13, %s20
      %p279 = scmp.lt.s32.totalorder %s278, 25
      %s280 = scalar_select %p279, %s278, 25
      %s281 = smul.addr %s280, 8
      %s282 = scalar_lea.vmem %s7, %s281
      %s283 = smul.u32 13, %s20
      %v284 = vld [vmem:[%s276] sm:$0xff]
      %v285 = vld [vmem:[%s276 + $0x8] sm:$0xff]
      %v286 = vld [vmem:[%s276 + $0x10] sm:$0xff]
      %v287 = vld [vmem:[%s276 + $0x18] sm:$0xff]
      %v288 = vld [vmem:[%s276 + $0x20] sm:$0xff]
      %v289 = vld [vmem:[%s276 + $0x28] sm:$0xff]
      %v290 = vld [vmem:[%s276 + $0x30] sm:$0xff]
      %v291 = vld [vmem:[%s276 + $0x38] sm:$0xff]
      %v292 = vld [vmem:[%s276 + $0x40] sm:$0xff]
      %v293 = vld [vmem:[%s276 + $0x48] sm:$0xff]
      %v294 = vld [vmem:[%s276 + $0x50] sm:$0xff]
      %v295 = vld [vmem:[%s276 + $0x58] sm:$0xff]
      %v296 = vld [vmem:[%s276 + $0x60] sm:$0xff]
      %v297 = vld [vmem:[%s1] sm:$0xff]
      %v298 = vld [vmem:[%s1 + $0x8] sm:$0xff]
      %v299 = vld [vmem:[%s1 + $0x10] sm:$0xff]
      %v300 = vld [vmem:[%s1 + $0x18] sm:$0xff]
      %v301 = vld [vmem:[%s1 + $0x20] sm:$0xff]
      %v302 = vld [vmem:[%s1 + $0x28] sm:$0xff]
      %v303 = vld [vmem:[%s1 + $0x30] sm:$0xff]
      %v304 = vld [vmem:[%s1 + $0x38] sm:$0xff]
      %v305 = vld [vmem:[%s2] sm:$0x1]
      %v307 = vlaneseq
      %v308 = vshrl.u32 %v307, 7
      %v309 = vsub.s32 0, %v308
      %v310 = vrot.slane %v305, %v309
      %vm312 = vcmask 523264
      %v314 = vsel %vm312, %v284, 0
      %v317 = vsel %vm312, %v285, 0
      %v320 = vsel %vm312, %v286, 0
      %v323 = vsel %vm312, %v287, 0
      %v326 = vsel %vm312, %v288, 0
      %v329 = vsel %vm312, %v289, 0
      %v332 = vsel %vm312, %v290, 0
      %v335 = vsel %vm312, %v291, 0
      %v338 = vsel %vm312, %v292, 0
      %v341 = vsel %vm312, %v293, 0
      %v344 = vsel %vm312, %v294, 0
      %v347 = vsel %vm312, %v295, 0
      %v350 = vsel %vm312, %v296, 0
      %352 = vmatprep.subr.mxu0 0.0
      %353 = vmatpush1.msra.mxu0 %v297
      %354 = vmatprep.subr.mxu0 0.0
      %355 = vmatpush1.msra.mxu0 %v298
      %356 = vmatprep.subr.mxu0 0.0
      %357 = vmatpush1.msra.mxu0 %v299
      %358 = vmatprep.subr.mxu0 0.0
      %359 = vmatpush1.msra.mxu0 %v300
      %360 = vmatprep.subr.mxu0 0.0
      %361 = vmatpush1.msra.mxu0 %v301
      %362 = vmatprep.subr.mxu0 0.0
      %363 = vmatpush1.msra.mxu0 %v302
      %364 = vmatprep.subr.mxu0 0.0
      %365 = vmatpush1.msra.mxu0 %v303
      %366 = vmatprep.subr.mxu0 0.0
      %367 = vmatpush1.msra.mxu0 %v304
      %368 = vmatprep.subr.mxu0 0.0
      %369 = vmatpush1.msra.mxu0 0.0
      %370 = vmatprep.subr.mxu0 0.0
      %371 = vmatpush1.msra.mxu0 0.0
      %372 = vmatprep.subr.mxu0 0.0
      %373 = vmatpush1.msra.mxu0 0.0
      %374 = vmatprep.subr.mxu0 0.0
      %375 = vmatpush1.msra.mxu0 0.0
      %376 = vmatprep.subr.mxu0 0.0
      %377 = vmatpush1.msra.mxu0 0.0
      %378 = vmatprep.subr.mxu0 0.0
      %379 = vmatpush1.msra.mxu0 0.0
      %380 = vmatprep.subr.mxu0 0.0
      %381 = vmatpush1.msra.mxu0 0.0
      %382 = vmatprep.subr.mxu0 0.0
      %383 = vmatpush1.msra.mxu0 0.0
      %384 = vmatprep.subr.mxu0 0.0
      %385 = vmatpush1.msra.mxu0 0.0
      %386 = vmatprep.subr.mxu0 0.0
      %387 = vmatpush1.msra.mxu0 0.0
      %388 = vmatprep.subr.mxu0 0.0
      %389 = vmatpush1.msra.mxu0 0.0
      %390 = vmatprep.subr.mxu0 0.0
      %391 = vmatpush1.msra.mxu0 0.0
      %392 = vmatprep.subr.mxu0 0.0
      %393 = vmatpush1.msra.mxu0 0.0
      %394 = vmatprep.subr.mxu0 0.0
      %395 = vmatpush1.msra.mxu0 0.0
      %396 = vmatprep.subr.mxu0 0.0
      %397 = vmatpush1.msra.mxu0 0.0
      %398 = vmatprep.subr.mxu0 0.0
      %399 = vmatpush1.msra.mxu0 0.0
      %400 = vmatprep.subr.mxu0 0.0
      %401 = vmatpush1.msra.mxu0 0.0
      %402 = vmatprep.subr.mxu0 0.0
      %403 = vmatpush1.msra.mxu0 0.0
      %404 = vmatprep.subr.mxu0 0.0
      %405 = vmatpush1.msra.mxu0 0.0
      %406 = vmatprep.subr.mxu0 0.0
      %407 = vmatpush1.msra.mxu0 0.0
      %408 = vmatprep.subr.mxu0 0.0
      %409 = vmatpush1.msra.mxu0 0.0
      %410 = vmatprep.subr.mxu0 0.0
      %411 = vmatpush1.msra.mxu0 0.0
      %412 = vmatprep.subr.mxu0 0.0
      %413 = vmatpush1.msra.mxu0 0.0
      %414 = vmatprep.subr.mxu0 0.0
      %415 = vmatpush1.msra.mxu0 0.0
      %416 = vmatprep.mubr.f32.mxu0 0.0
      %417 = vmatmul.mubr.f32.gmra.mrb[0].mxu0 %v314
      %v418 = vpop.f32.mrb[0].mxu0
      %v419 = vadd.f32 %v310, %v418
      %v420 = vpop.f32.mrb[0].mxu0
      %421 = vmatprep.mubr.f32.mxu0 0.0
      %422 = vmatmul.mubr.f32.gmra.mrb[0].mxu0 %v317
      %v423 = vpop.f32.mrb[0].mxu0
      %v424 = vadd.f32 %v310, %v423
      %v425 = vpop.f32.mrb[0].mxu0
      %426 = vmatprep.mubr.f32.mxu0 0.0
      %427 = vmatmul.mubr.f32.gmra.mrb[0].mxu0 %v320
      %v428 = vpop.f32.mrb[0].mxu0
      %v429 = vadd.f32 %v310, %v428
      %v430 = vpop.f32.mrb[0].mxu0
      %431 = vmatprep.mubr.f32.mxu0 0.0
      %432 = vmatmul.mubr.f32.gmra.mrb[0].mxu0 %v323
      %v433 = vpop.f32.mrb[0].mxu0
      %v434 = vadd.f32 %v310, %v433
      %v435 = vpop.f32.mrb[0].mxu0
      %436 = vmatprep.mubr.f32.mxu0 0.0
      %437 = vmatmul.mubr.f32.gmra.mrb[0].mxu0 %v326
      %v438 = vpop.f32.mrb[0].mxu0
      %v439 = vadd.f32 %v310, %v438
      %v440 = vpop.f32.mrb[0].mxu0
      %441 = vmatprep.mubr.f32.mxu0 0.0
      %442 = vmatmul.mubr.f32.gmra.mrb[0].mxu0 %v329
      %v443 = vpop.f32.mrb[0].mxu0
      %v444 = vadd.f32 %v310, %v443
      %v445 = vpop.f32.mrb[0].mxu0
      %446 = vmatprep.mubr.f32.mxu0 0.0
      %447 = vmatmul.mubr.f32.gmra.mrb[0].mxu0 %v332
      %v448 = vpop.f32.mrb[0].mxu0
      %v449 = vadd.f32 %v310, %v448
      %v450 = vpop.f32.mrb[0].mxu0
      %451 = vmatprep.mubr.f32.mxu0 0.0
      %452 = vmatmul.mubr.f32.gmra.mrb[0].mxu0 %v335
      %v453 = vpop.f32.mrb[0].mxu0
      %v454 = vadd.f32 %v310, %v453
      %v455 = vpop.f32.mrb[0].mxu0
      %456 = vmatprep.mubr.f32.mxu0 0.0
      %457 = vmatmul.mubr.f32.gmra.mrb[0].mxu0 %v338
      %v458 = vpop.f32.mrb[0].mxu0
      %v459 = vadd.f32 %v310, %v458
      %v460 = vpop.f32.mrb[0].mxu0
      %461 = vmatprep.mubr.f32.mxu0 0.0
      %462 = vmatmul.mubr.f32.gmra.mrb[0].mxu0 %v341
      %v463 = vpop.f32.mrb[0].mxu0
      %v464 = vadd.f32 %v310, %v463
      %v465 = vpop.f32.mrb[0].mxu0
      %466 = vmatprep.mubr.f32.mxu0 0.0
      %467 = vmatmul.mubr.f32.gmra.mrb[0].mxu0 %v344
      %v468 = vpop.f32.mrb[0].mxu0
      %v469 = vadd.f32 %v310, %v468
      %v470 = vpop.f32.mrb[0].mxu0
      %471 = vmatprep.mubr.f32.mxu0 0.0
      %472 = vmatmul.mubr.f32.gmra.mrb[0].mxu0 %v347
      %v473 = vpop.f32.mrb[0].mxu0
      %v474 = vadd.f32 %v310, %v473
      %v475 = vpop.f32.mrb[0].mxu0
      %476 = vmatprep.mubr.f32.mxu0 0.0
      %477 = vmatmul.mubr.f32.gmra.mrb[0].mxu0 %v350
      %v478 = vpop.f32.mrb[0].mxu0
      %v479 = vadd.f32 %v310, %v478
      %v480 = vpop.f32.mrb[0].mxu0
      %481 = vdwg.mxu0
      %v482 = vmax.f32 %v419, 0.0
      %v483 = vmax.f32 %v424, 0.0
      %v484 = vmax.f32 %v429, 0.0
      %v485 = vmax.f32 %v434, 0.0
      %v486 = vmax.f32 %v439, 0.0
      %v487 = vmax.f32 %v444, 0.0
      %v488 = vmax.f32 %v449, 0.0
      %v489 = vmax.f32 %v454, 0.0
      %v490 = vmax.f32 %v459, 0.0
      %v491 = vmax.f32 %v464, 0.0
      %v492 = vmax.f32 %v469, 0.0
      %v493 = vmax.f32 %v474, 0.0
      %v494 = vmax.f32 %v479, 0.0
      %v495 = vld [vmem:[%s3] sm:$0xff]
      %v496 = vld [vmem:[%s3 + $0x8] sm:$0xff]
      %v497 = vld [vmem:[%s3 + $0x10] sm:$0xff]
      %v498 = vld [vmem:[%s3 + $0x18] sm:$0xff]
      %v499 = vld [vmem:[%s3 + $0x20] sm:$0xff]
      %v500 = vld [vmem:[%s3 + $0x28] sm:$0xff]
      %v501 = vld [vmem:[%s3 + $0x30] sm:$0xff]
      %v502 = vld [vmem:[%s3 + $0x38] sm:$0xff]
      %v503 = vld [vmem:[%s3 + $0x40] sm:$0xff]
      %v504 = vld [vmem:[%s3 + $0x48] sm:$0xff]
      %v505 = vld [vmem:[%s3 + $0x50] sm:$0xff]
      %v506 = vld [vmem:[%s3 + $0x58] sm:$0xff]
      %v507 = vld [vmem:[%s3 + $0x60] sm:$0xff]
      %v508 = vld [vmem:[%s3 + $0x68] sm:$0xff]
      %v509 = vld [vmem:[%s3 + $0x70] sm:$0xff]
      %v510 = vld [vmem:[%s3 + $0x78] sm:$0xff]
      %v511 = vld [vmem:[%s4] sm:$0x1]
      %v513 = vlaneseq
      %v514 = vshrl.u32 %v513, 7
      %v515 = vsub.s32 0, %v514
      %v516 = vrot.slane %v511, %v515
      %518 = vmatprep.subr.mxu0 0.0
      %519 = vmatpush1.msra.mxu0 %v495
      %520 = vmatprep.subr.mxu0 0.0
      %521 = vmatpush1.msra.mxu0 %v496
      %522 = vmatprep.subr.mxu0 0.0
      %523 = vmatpush1.msra.mxu0 %v497
      %524 = vmatprep.subr.mxu0 0.0
      %525 = vmatpush1.msra.mxu0 %v498
      %526 = vmatprep.subr.mxu0 0.0
      %527 = vmatpush1.msra.mxu0 %v499
      %528 = vmatprep.subr.mxu0 0.0
      %529 = vmatpush1.msra.mxu0 %v500
      %530 = vmatprep.subr.mxu0 0.0
      %531 = vmatpush1.msra.mxu0 %v501
      %532 = vmatprep.subr.mxu0 0.0
      %533 = vmatpush1.msra.mxu0 %v502
      %534 = vmatprep.subr.mxu0 0.0
      %535 = vmatpush1.msra.mxu0 %v503
      %536 = vmatprep.subr.mxu0 0.0
      %537 = vmatpush1.msra.mxu0 %v504
      %538 = vmatprep.subr.mxu0 0.0
      %539 = vmatpush1.msra.mxu0 %v505
      %540 = vmatprep.subr.mxu0 0.0
      %541 = vmatpush1.msra.mxu0 %v506
      %542 = vmatprep.subr.mxu0 0.0
      %543 = vmatpush1.msra.mxu0 %v507
      %544 = vmatprep.subr.mxu0 0.0
      %545 = vmatpush1.msra.mxu0 %v508
      %546 = vmatprep.subr.mxu0 0.0
      %547 = vmatpush1.msra.mxu0 %v509
      %548 = vmatprep.subr.mxu0 0.0
      %549 = vmatpush1.msra.mxu0 %v510
      %550 = vmatprep.subr.mxu0 0.0
      %551 = vmatpush1.msra.mxu0 0.0
      %552 = vmatprep.subr.mxu0 0.0
      %553 = vmatpush1.msra.mxu0 0.0
      %554 = vmatprep.subr.mxu0 0.0
      %555 = vmatpush1.msra.mxu0 0.0
      %556 = vmatprep.subr.mxu0 0.0
      %557 = vmatpush1.msra.mxu0 0.0
      %558 = vmatprep.subr.mxu0 0.0
      %559 = vmatpush1.msra.mxu0 0.0
      %560 = vmatprep.subr.mxu0 0.0
      %561 = vmatpush1.msra.mxu0 0.0
      %562 = vmatprep.subr.mxu0 0.0
      %563 = vmatpush1.msra.mxu0 0.0
      %564 = vmatprep.subr.mxu0 0.0
      %565 = vmatpush1.msra.mxu0 0.0
      %566 = vmatprep.subr.mxu0 0.0
      %567 = vmatpush1.msra.mxu0 0.0
      %568 = vmatprep.subr.mxu0 0.0
      %569 = vmatpush1.msra.mxu0 0.0
      %570 = vmatprep.subr.mxu0 0.0
      %571 = vmatpush1.msra.mxu0 0.0
      %572 = vmatprep.subr.mxu0 0.0
      %573 = vmatpush1.msra.mxu0 0.0
      %574 = vmatprep.subr.mxu0 0.0
      %575 = vmatpush1.msra.mxu0 0.0
      %576 = vmatprep.subr.mxu0 0.0
      %577 = vmatpush1.msra.mxu0 0.0
      %578 = vmatprep.subr.mxu0 0.0
      %579 = vmatpush1.msra.mxu0 0.0
      %580 = vmatprep.subr.mxu0 0.0
      %581 = vmatpush1.msra.mxu0 0.0
      %582 = vmatprep.mubr.f32.mxu0 0.0
      %583 = vmatmul.mubr.f32.gmra.mrb[0].mxu0 %v482
      %v584 = vpop.f32.mrb[0].mxu0
      %v585 = vadd.f32 %v516, %v584
      %v586 = vpop.f32.mrb[0].mxu0
      %587 = vmatprep.mubr.f32.mxu0 0.0
      %588 = vmatmul.mubr.f32.gmra.mrb[0].mxu0 %v483
      %v589 = vpop.f32.mrb[0].mxu0
      %v590 = vadd.f32 %v516, %v589
      %v591 = vpop.f32.mrb[0].mxu0
      %592 = vmatprep.mubr.f32.mxu0 0.0
      %593 = vmatmul.mubr.f32.gmra.mrb[0].mxu0 %v484
      %v594 = vpop.f32.mrb[0].mxu0
      %v595 = vadd.f32 %v516, %v594
      %v596 = vpop.f32.mrb[0].mxu0
      %597 = vmatprep.mubr.f32.mxu0 0.0
      %598 = vmatmul.mubr.f32.gmra.mrb[0].mxu0 %v485
      %v599 = vpop.f32.mrb[0].mxu0
      %v600 = vadd.f32 %v516, %v599
      %v601 = vpop.f32.mrb[0].mxu0
      %602 = vmatprep.mubr.f32.mxu0 0.0
      %603 = vmatmul.mubr.f32.gmra.mrb[0].mxu0 %v486
      %v604 = vpop.f32.mrb[0].mxu0
      %v605 = vadd.f32 %v516, %v604
      %v606 = vpop.f32.mrb[0].mxu0
      %607 = vmatprep.mubr.f32.mxu0 0.0
      %608 = vmatmul.mubr.f32.gmra.mrb[0].mxu0 %v487
      %v609 = vpop.f32.mrb[0].mxu0
      %v610 = vadd.f32 %v516, %v609
      %v611 = vpop.f32.mrb[0].mxu0
      %612 = vmatprep.mubr.f32.mxu0 0.0
      %613 = vmatmul.mubr.f32.gmra.mrb[0].mxu0 %v488
      %v614 = vpop.f32.mrb[0].mxu0
      %v615 = vadd.f32 %v516, %v614
      %v616 = vpop.f32.mrb[0].mxu0
      %617 = vmatprep.mubr.f32.mxu0 0.0
      %618 = vmatmul.mubr.f32.gmra.mrb[0].mxu0 %v489
      %v619 = vpop.f32.mrb[0].mxu0
      %v620 = vadd.f32 %v516, %v619
      %v621 = vpop.f32.mrb[0].mxu0
      %622 = vmatprep.mubr.f32.mxu0 0.0
      %623 = vmatmul.mubr.f32.gmra.mrb[0].mxu0 %v490
      %v624 = vpop.f32.mrb[0].mxu0
      %v625 = vadd.f32 %v516, %v624
      %v626 = vpop.f32.mrb[0].mxu0
      %627 = vmatprep.mubr.f32.mxu0 0.0
      %628 = vmatmul.mubr.f32.gmra.mrb[0].mxu0 %v491
      %v629 = vpop.f32.mrb[0].mxu0
      %v630 = vadd.f32 %v516, %v629
      %v631 = vpop.f32.mrb[0].mxu0
      %632 = vmatprep.mubr.f32.mxu0 0.0
      %633 = vmatmul.mubr.f32.gmra.mrb[0].mxu0 %v492
      %v634 = vpop.f32.mrb[0].mxu0
      %v635 = vadd.f32 %v516, %v634
      %v636 = vpop.f32.mrb[0].mxu0
      %637 = vmatprep.mubr.f32.mxu0 0.0
      %638 = vmatmul.mubr.f32.gmra.mrb[0].mxu0 %v493
      %v639 = vpop.f32.mrb[0].mxu0
      %v640 = vadd.f32 %v516, %v639
      %v641 = vpop.f32.mrb[0].mxu0
      %642 = vmatprep.mubr.f32.mxu0 0.0
      %643 = vmatmul.mubr.f32.gmra.mrb[0].mxu0 %v494
      %v644 = vpop.f32.mrb[0].mxu0
      %v645 = vadd.f32 %v516, %v644
      %v646 = vpop.f32.mrb[0].mxu0
      %647 = vdwg.mxu0
      %v648 = vmax.f32 %v585, 0.0
      %v649 = vmax.f32 %v590, 0.0
      %v650 = vmax.f32 %v595, 0.0
      %v651 = vmax.f32 %v600, 0.0
      %v652 = vmax.f32 %v605, 0.0
      %v653 = vmax.f32 %v610, 0.0
      %v654 = vmax.f32 %v615, 0.0
      %v655 = vmax.f32 %v620, 0.0
      %v656 = vmax.f32 %v625, 0.0
      %v657 = vmax.f32 %v630, 0.0
      %v658 = vmax.f32 %v635, 0.0
      %v659 = vmax.f32 %v640, 0.0
      %v660 = vmax.f32 %v645, 0.0
      %v661 = vld [vmem:[%s5] sm:$0x1]
      %v663 = vlaneseq
      %v664 = vshrl.u32 %v663, 7
      %v665 = vsub.s32 0, %v664
      %v666 = vrot.slane %v661, %v665
      %v668 = vmul.f32 %v648, %v666
      %v669 = vmul.f32 %v649, %v666
      %v670 = vmul.f32 %v650, %v666
      %v671 = vmul.f32 %v651, %v666
      %v672 = vmul.f32 %v652, %v666
      %v673 = vmul.f32 %v653, %v666
      %v674 = vmul.f32 %v654, %v666
      %v675 = vmul.f32 %v655, %v666
      %v676 = vmul.f32 %v656, %v666
      %v677 = vmul.f32 %v657, %v666
      %v678 = vmul.f32 %v658, %v666
      %v679 = vmul.f32 %v659, %v666
      %v680 = vmul.f32 %v660, %v666
      %681 = vadd.xlane.f32.xlu0 %v668
      %v682 = vpop.xlane.xlu0 %681
      %683 = vadd.xlane.f32.xlu0 %v669
      %v684 = vpop.xlane.xlu0 %683
      %685 = vadd.xlane.f32.xlu0 %v670
      %v686 = vpop.xlane.xlu0 %685
      %687 = vadd.xlane.f32.xlu0 %v671
      %v688 = vpop.xlane.xlu0 %687
      %689 = vadd.xlane.f32.xlu0 %v672
      %v690 = vpop.xlane.xlu0 %689
      %691 = vadd.xlane.f32.xlu0 %v673
      %v692 = vpop.xlane.xlu0 %691
      %693 = vadd.xlane.f32.xlu0 %v674
      %v694 = vpop.xlane.xlu0 %693
      %695 = vadd.xlane.f32.xlu0 %v675
      %v696 = vpop.xlane.xlu0 %695
      %697 = vadd.xlane.f32.xlu0 %v676
      %v698 = vpop.xlane.xlu0 %697
      %699 = vadd.xlane.f32.xlu0 %v677
      %v700 = vpop.xlane.xlu0 %699
      %701 = vadd.xlane.f32.xlu0 %v678
      %v702 = vpop.xlane.xlu0 %701
      %703 = vadd.xlane.f32.xlu0 %v679
      %v704 = vpop.xlane.xlu0 %703
      %705 = vadd.xlane.f32.xlu0 %v680
      %v706 = vpop.xlane.xlu0 %705
      %v707 = vld [vmem:[#allocation2] sm:$0x1]
      %v709 = vlaneseq
      %v710 = vshrl.u32 %v709, 7
      %v711 = vsub.s32 0, %v710
      %v712 = vrot.slane %v707, %v711
      %v714 = vadd.f32 %v682, %v712
      %v715 = vadd.f32 %v684, %v712
      %v716 = vadd.f32 %v686, %v712
      %v717 = vadd.f32 %v688, %v712
      %v718 = vadd.f32 %v690, %v712
      %v719 = vadd.f32 %v692, %v712
      %v720 = vadd.f32 %v694, %v712
      %v721 = vadd.f32 %v696, %v712
      %v722 = vadd.f32 %v698, %v712
      %v723 = vadd.f32 %v700, %v712
      %v724 = vadd.f32 %v702, %v712
      %v725 = vadd.f32 %v704, %v712
      %v726 = vadd.f32 %v706, %v712
      %v727 = vmul.f32 %v714, 0.5
      %v728 = vmul.f32 %v715, 0.5
      %v729 = vmul.f32 %v716, 0.5
      %v730 = vmul.f32 %v717, 0.5
      %v731 = vmul.f32 %v718, 0.5
      %v732 = vmul.f32 %v719, 0.5
      %v733 = vmul.f32 %v720, 0.5
      %v734 = vmul.f32 %v721, 0.5
      %v735 = vmul.f32 %v722, 0.5
      %v736 = vmul.f32 %v723, 0.5
      %v737 = vmul.f32 %v724, 0.5
      %v738 = vmul.f32 %v725, 0.5
      %v739 = vmul.f32 %v726, 0.5
      %v740 = vtanh.pop %v727
      %v741 = vtanh.pop %v728
      %v742 = vtanh.pop %v729
      %v743 = vtanh.pop %v730
      %v744 = vtanh.pop %v731
      %v745 = vtanh.pop %v732
      %v746 = vtanh.pop %v733
      %v747 = vtanh.pop %v734
      %v748 = vtanh.pop %v735
      %v749 = vtanh.pop %v736
      %v750 = vtanh.pop %v737
      %v751 = vtanh.pop %v738
      %v752 = vtanh.pop %v739
      %v753 = vadd.f32 %v740, 1.0
      %v754 = vadd.f32 %v741, 1.0
      %v755 = vadd.f32 %v742, 1.0
      %v756 = vadd.f32 %v743, 1.0
      %v757 = vadd.f32 %v744, 1.0
      %v758 = vadd.f32 %v745, 1.0
      %v759 = vadd.f32 %v746, 1.0
      %v760 = vadd.f32 %v747, 1.0
      %v761 = vadd.f32 %v748, 1.0
      %v762 = vadd.f32 %v749, 1.0
      %v763 = vadd.f32 %v750, 1.0
      %v764 = vadd.f32 %v751, 1.0
      %v765 = vadd.f32 %v752, 1.0
      %v766 = vmul.f32 %v753, 0.5
      %v767 = vmul.f32 %v754, 0.5
      %v768 = vmul.f32 %v755, 0.5
      %v769 = vmul.f32 %v756, 0.5
      %v770 = vmul.f32 %v757, 0.5
      %v771 = vmul.f32 %v758, 0.5
      %v772 = vmul.f32 %v759, 0.5
      %v773 = vmul.f32 %v760, 0.5
      %v774 = vmul.f32 %v761, 0.5
      %v775 = vmul.f32 %v762, 0.5
      %v776 = vmul.f32 %v763, 0.5
      %v777 = vmul.f32 %v764, 0.5
      %v778 = vmul.f32 %v765, 0.5
      %vm779 = vcmask 7168
      %780 = vst.msk [vmem:[%s282] sm:$0xff] %vm779, %v766
      %781 = vst.msk [vmem:[%s282 + $0x8] sm:$0xff] %vm779, %v767
      %782 = vst.msk [vmem:[%s282 + $0x10] sm:$0xff] %vm779, %v768
      %783 = vst.msk [vmem:[%s282 + $0x18] sm:$0xff] %vm779, %v769
      %784 = vst.msk [vmem:[%s282 + $0x20] sm:$0xff] %vm779, %v770
      %785 = vst.msk [vmem:[%s282 + $0x28] sm:$0xff] %vm779, %v771
      %786 = vst.msk [vmem:[%s282 + $0x30] sm:$0xff] %vm779, %v772
      %787 = vst.msk [vmem:[%s282 + $0x38] sm:$0xff] %vm779, %v773
      %788 = vst.msk [vmem:[%s282 + $0x40] sm:$0xff] %vm779, %v774
      %789 = vst.msk [vmem:[%s282 + $0x48] sm:$0xff] %vm779, %v775
      %790 = vst.msk [vmem:[%s282 + $0x50] sm:$0xff] %vm779, %v776
      %791 = vst.msk [vmem:[%s282 + $0x58] sm:$0xff] %vm779, %v777
      %792 = vst.msk [vmem:[%s282 + $0x60] sm:$0xff] %vm779, %v778
      %s793 = smul.u32 13, %s20
      %p794 = scmp.lt.s32.totalorder %s793, 25
      %s795 = scalar_select %p794, %s793, 25
      %s796 = smul.addr %s795, 8
      %s797 = scalar_lea.vmem %s7, %s796
      // Predicated region
      $region49: #{tpu_custom_call.1} parent=47 // pred_check
        %p798 = pneg %p190
      $region50: #{tpu_custom_call.1} parent=47 // pred_check_branch
        %800 = sbr.rel (%p798) target = $region52
      $region51: #{tpu_custom_call.1} parent=47 // pred_region
        %s801 = smul.u32 13, %s20
      $region52: #{tpu_custom_call.1} parent=47 // pred_fallthru
        _
    $region48: #{tpu_custom_call.1} parent=5 // pred_fallthru
      _
    %p802 = scmp.le.s32.totalorder 2, %s15
    // Predicated region
    $region53: #{tpu_custom_call.1} parent=5 // pred_check
      %p803 = pneg %p802
    $region54: #{tpu_custom_call.1} parent=5 // pred_check_branch
      %805 = sbr.rel (%p803) target = $region56
    $region55: #{tpu_custom_call.1} parent=5 // pred_region
      %s806 = ssub.s32 %s15, 2
      // Predicated region
      $region57: #{tpu_custom_call.1} parent=55 // pred_check
        %p807 = pneg %p196
      $region58: #{tpu_custom_call.1} parent=55 // pred_check_branch
        %809 = sbr.rel (%p807) target = $region60
      $region59: #{tpu_custom_call.1} parent=55 // pred_region
        %s810 = smul.u32 13, %s21
        %p811 = scmp.lt.s32.totalorder %s810, 25
        %s812 = scalar_select %p811, %s810, 25
        %s813 = smul.addr %s812, 8
        %s814 = scalar_lea.vmem %s7, %s813
      $region60: #{tpu_custom_call.1} parent=55 // pred_fallthru
        _
    $region56: #{tpu_custom_call.1} parent=5 // pred_fallthru
      _
  $region6: #{tpu_custom_call.1} parent=0 // loop_footer
    %s19 = sadd.s32 1, %s15
  $region7: #{tpu_custom_call.1} parent=0 // loop_footer_branch
    %14 = sbr.rel target = $region3
  $region8: #{tpu_custom_call.1} parent=0 // loop_exit
    _

</llo_original>
